<compile_context>
chip_gen: v7x
topology: tpu7x:2x2x1
jax: 0.10.0
libtpu: 0.0.40
codegen_flags: <defaults>
</compile_context>

<pallas_src>
import functools

import jax
import jax.numpy as jnp
from jax import lax
from jax.experimental import pallas as pl
from jax.experimental.pallas import tpu as pltpu


def _round_up(x, m):
    return ((x + m - 1) // m) * m


def _score_kernel(src_ref, tgt_ref, out_ref, *, eps):
    """One (tm, Mp) output tile: full-C matmul + elementwise epilogue."""
    # src_ref: (tm, C), tgt_ref: (Mp, C). Contract last dims -> (tm, Mp) on MXU.
    xy = lax.dot_general(
        src_ref[...],
        tgt_ref[...],
        dimension_numbers=(((1,), (1,)), ((), ())),
        preferred_element_type=jnp.float32,
    )
    # normalized pairwise distance: clamp(2 - 2*<x,y>, 0), then sqrt(. + eps).
    sq_dist = jnp.maximum(2.0 - 2.0 * xy, 0.0)
    out_ref[...] = jnp.sqrt(sq_dist + eps).astype(out_ref.dtype)


def superpoint_matching_denoising(src_feats, tgt_feats, eps=1e-8, tm=512):
    """Pallas implementation of SuperPointMatchingDenoising.forward.

    src_feats: (N, C) float, assumed L2-normalized along C (normalized=True path).
    tgt_feats: (M, C) float, assumed L2-normalized along C.
    Returns score_mat: (N, M) float32.
    src_masks / tgt_masks are unused by the reference forward, so they are omitted.
    """
    N, C = src_feats.shape
    M, C2 = tgt_feats.shape
    assert C == C2, "channel dims must match"

    # ---- tile / padding selection -------------------------------------------
    # Lane-dense output: pad M up to a multiple of 128 -> unmasked vector stores.
    Mp = _round_up(M, 128)

    # Row tile: as large as reasonable, multiple of 8, and prefer >= 2 grid
    # steps so the "parallel" axis can shard across both v7x TensorCores.
    Np8 = _round_up(N, 8)
    tm = min(int(tm), Np8)
    if Np8 // tm < 2:
        half = _round_up((Np8 + 1) // 2, 8)
        if 8 <= half < tm:
            tm = half
    Np = _round_up(N, tm)

    grid = (Np // tm,)

    # ---- pad inputs (zero rows are sliced off the output afterwards) --------
    src_p = src_feats if Np == N else jnp.pad(src_feats, ((0, Np - N), (0, 0)))
    tgt_p = tgt_feats if Mp == M else jnp.pad(tgt_feats, ((0, Mp - M), (0, 0)))

    # ---- VMEM budget: double-buffered src tile + resident tgt + 2x out tile --
    needed_bytes = 4 * (2 * tm * C + Mp * C + 2 * tm * Mp)
    vmem_limit = min(max(2 * needed_bytes, 16 * 1024 * 1024), 64 * 1024 * 1024)
    # TODO(synk): if M*C ever outgrows VMEM (unrealistic for SuperPoint counts),
    # add a second grid axis tiling Mp instead of keeping tgt fully resident.

    cost = pl.CostEstimate(
        flops=2 * Np * Mp * C,
        transcendentals=Np * Mp,  # one sqrt per output element
        bytes_accessed=4 * (Np * C + Mp * C + Np * Mp),
    )

    kernel = functools.partial(_score_kernel, eps=float(eps))

    out_p = pl.pallas_call(
        kernel,
        out_shape=jax.ShapeDtypeStruct((Np, Mp), jnp.float32),
        grid_spec=pltpu.PrefetchScalarGridSpec(
            num_scalar_prefetch=0,
            grid=grid,
            in_specs=[
                pl.BlockSpec((tm, C), lambda i: (i, 0)),   # src: streamed over N
                pl.BlockSpec((Mp, C), lambda i: (0, 0)),   # tgt: fully VMEM-resident
            ],
            out_specs=pl.BlockSpec((tm, Mp), lambda i: (i, 0)),  # lane-dense out
        ),
        compiler_params=pltpu.CompilerParams(
            dimension_semantics=("parallel",),
            vmem_limit_bytes=vmem_limit,
        ),
        cost_estimate=cost,
    )(src_p, tgt_p)

    if Np != N or Mp != M:
        out_p = out_p[:N, :M]
    return out_p


def _reference(src_feats, tgt_feats, eps=1e-8):
    xy = src_feats @ tgt_feats.T
    sq = jnp.maximum(2.0 - 2.0 * xy, 0.0)
    return jnp.sqrt(sq + eps)


if __name__ == "__main__":
    key = jax.random.PRNGKey(0)
    k1, k2, k3, k4 = jax.random.split(key, 4)

    # Case 1: aligned shapes (typical padded superpoint counts).
    N, M, C = 256, 128, 64
    src = jax.random.normal(k1, (N, C), dtype=jnp.float32)
    tgt = jax.random.normal(k2, (M, C), dtype=jnp.float32)
    # forward assumes normalized=True, i.e. features are L2-normalized along channels
    src = src / (jnp.linalg.norm(src, axis=-1, keepdims=True) + 1e-12)
    tgt = tgt / (jnp.linalg.norm(tgt, axis=-1, keepdims=True) + 1e-12)

    score_mat = jax.block_until_ready(superpoint_matching_denoising(src, tgt, eps=1e-8))
    ref = _reference(src, tgt, eps=1e-8)
    assert score_mat.shape == (N, M)
    assert jnp.allclose(score_mat, ref, atol=1e-4, rtol=1e-4)

    # Case 2: ragged shapes (exercises padding + slicing path).
    N2, M2, C2 = 200, 150, 64
    src2 = jax.random.normal(k3, (N2, C2), dtype=jnp.float32)
    tgt2 = jax.random.normal(k4, (M2, C2), dtype=jnp.float32)
    src2 = src2 / (jnp.linalg.norm(src2, axis=-1, keepdims=True) + 1e-12)
    tgt2 = tgt2 / (jnp.linalg.norm(tgt2, axis=-1, keepdims=True) + 1e-12)

    score_mat2 = jax.block_until_ready(superpoint_matching_denoising(src2, tgt2, eps=1e-8))
    ref2 = _reference(src2, tgt2, eps=1e-8)
    assert score_mat2.shape == (N2, M2)
    assert jnp.allclose(score_mat2, ref2, atol=1e-4, rtol=1e-4)

    print("KERNEL_OK")
</pallas_src>

<mosaic_0001>
module attributes {stable_mosaic.version = 11 : i64} {
  func.func @_score_kernel(%arg0: i32, %arg1: memref<128x64xf32, #tpu.memory_space<vmem>>, %arg2: memref<128x64xf32, #tpu.memory_space<vmem>>, %arg3: memref<128x128xf32, #tpu.memory_space<vmem>>) attributes {dimension_semantics = [#tpu.dimension_semantics<parallel>], iteration_bounds = array<i64: 2>, scalar_prefetch = 0 : i64, scratch_operands = 0 : i64, tpu.core_type = #tpu.core_type<tc>, window_params = [{transform_indices = @transform_0, window_bounds = array<i64: 128, 64>}, {pipeline_mode = #tpu.pipeline_mode<synchronous>, transform_indices = @transform_1, window_bounds = array<i64: 128, 64>}, {transform_indices = @transform_2, window_bounds = array<i64: 128, 128>}]} {
    %c0 = arith.constant 0 : index
    %c0_0 = arith.constant 0 : index
    %0 = vector.load %arg1[%c0, %c0_0] : memref<128x64xf32, #tpu.memory_space<vmem>>, vector<128x64xf32>
    %c0_1 = arith.constant 0 : index
    %c0_2 = arith.constant 0 : index
    %1 = vector.load %arg2[%c0_1, %c0_2] : memref<128x64xf32, #tpu.memory_space<vmem>>, vector<128x64xf32>
    %cst = arith.constant dense<0.000000e+00> : vector<128x128xf32>
    %2 = tpu.matmul %0, %1, %cst {dimension_numbers = #tpu.dot_dimension_numbers<[1], [1], [0], [0], [0, 0, 1, 0], [], []>} : vector<128x64xf32>, vector<128x64xf32>, vector<128x128xf32> -> vector<128x128xf32>
    %cst_3 = arith.constant 2.000000e+00 : f32
    %3 = vector.broadcast %cst_3 : f32 to vector<128x128xf32>
    %4 = arith.mulf %3, %2 : vector<128x128xf32>
    %cst_4 = arith.constant 2.000000e+00 : f32
    %5 = vector.broadcast %cst_4 : f32 to vector<128x128xf32>
    %6 = arith.subf %5, %4 : vector<128x128xf32>
    %cst_5 = arith.constant 0.000000e+00 : f32
    %7 = vector.broadcast %cst_5 : f32 to vector<128x128xf32>
    %8 = arith.maximumf %6, %7 : vector<128x128xf32>
    %cst_6 = arith.constant 9.99999993E-9 : f32
    %9 = vector.broadcast %cst_6 : f32 to vector<128x128xf32>
    %10 = arith.addf %8, %9 : vector<128x128xf32>
    %11 = math.sqrt %10 : vector<128x128xf32>
    %c0_7 = arith.constant 0 : index
    %c0_8 = arith.constant 0 : index
    %12 = vector.load %arg3[%c0_7, %c0_8] : memref<128x128xf32, #tpu.memory_space<vmem>>, vector<128x128xf32>
    tpu.vector_store %arg3[%c0_7, %c0_8], %11 {strides = array<i32>} : memref<128x128xf32, #tpu.memory_space<vmem>>, vector<128x128xf32>,
    return
  }
  func.func @transform_0(%arg0: i32) -> (i32, i32) {
    %c0_i32 = arith.constant 0 : i32
    %c0_i32_0 = arith.constant 0 : i32
    return %arg0, %c0_i32 : i32, i32
  }
  func.func @transform_1(%arg0: i32) -> (i32, i32) {
    %c0_i32 = arith.constant 0 : i32
    %c0_i32_0 = arith.constant 0 : i32
    %c0_i32_1 = arith.constant 0 : i32
    return %c0_i32, %c0_i32_0 : i32, i32
  }
  func.func @transform_2(%arg0: i32) -> (i32, i32) {
    %c0_i32 = arith.constant 0 : i32
    %c0_i32_0 = arith.constant 0 : i32
    return %arg0, %c0_i32 : i32, i32
  }
}

</mosaic_0001>

<llo_original>
// kernel: tpu_custom_call.1
$region0: #{tpu_custom_call.1}
  #allocation0 [shape = 'u32[]', space=smem, size = 0x4, offset = 0x4, fixed_abs, tag = 'smem constant byte address 0x4 - core index']
  #allocation1 [shape = 'u32[144,128]{1,0:T(1,128)}', space=vmem, size = 0x12000, scoped, tag = 'internal scratch']
  %s0 = inlined_call_operand.vmem [shape: f32[256,64], index: 0, kind: input, shape index: {}]
  %s1 = inlined_call_operand.vmem [shape: f32[128,64], index: 1, kind: input, shape index: {}]
  %s2 = inlined_call_operand.hbm [shape: f32[256,128], index: 2, kind: output, shape index: {}]
  %s3 = sld [smem:[#allocation0]]
  $region41: #{tpu_custom_call.1} parent=0
    _
  %s5 = ssub.s32 1, %s3
  %s6 = scalar_select 0, %s5, %s3
  $region1: #{tpu_custom_call.1} parent=0
    #allocation2 [shape = 'u8[131072]{0}', space=vmem, size = 0x20000, scoped, tag = 'output window, operand 0']
    #allocation3 [shape = 's32[2]{0}', space=sflag, size = 0x8, scoped, tag = 'scoped memory for tpu_custom_call.1']
    %7 = vsyncpa [#allocation3], 0
    %s8 = scalar_lea.sflag [#allocation3], 1
    %9 = vsyncpa %s8, 0
    loop: start=0, step=1, limit=4
    $region2: #{tpu_custom_call.1} parent=1 // loop_pre_header
      _
    $region3: #{tpu_custom_call.1} parent=1 // loop_header
      %s11 = sphi 0, %s15
      %p12 = scmp.ge.s32.totalorder %s11, 4
      %s21 = sphi 0, %s23
      %s24 = sphi 0, %s21
      %s25 = sphi 0, %s24
      %s41 = sphi 0, %s25
      %s45 = sphi 0, %s45
      %s47 = sphi 0, %s45
      %s48 = sphi 0, %s47
      %s62 = sphi 0, %s48
      %s68 = sphi 0, %s70
      %s71 = sphi 0, %s68
      %s72 = sphi 0, %s71
      %s88 = sphi 0, %s72
    $region4: #{tpu_custom_call.1} parent=1 // loop_header_branch
      %14 = sbr.rel (%p12) target = $region8
    $region5: #{tpu_custom_call.1} parent=1 // loop_body
      %s16 = ssub.s32 %s11, 1
      %s17 = ssub.s32 %s11, 2
      %s18 = sadd.s32 %s11, 1
      %s19 = ssub.s32 %s11, %s18
      %p20 = scmp.eq.s32.totalorder %s19, 0
      %s22 = sadd.s32 %s21, 1
      %s23 = scalar_select %p20, %s21, %s22
      %p26 = pneg %p20
      %p27 = scmp.eq.s32.totalorder %s11, 1
      %p28 = por %p26, %p27
      %p29 = scmp.ne.s32.totalorder %s21, %s24
      %p30 = scmp.eq.s32.totalorder %s11, 0
      %p31 = por %p29, %p30
      %p32 = scmp.ne.s32.totalorder %s21, %s24
      %p33 = scmp.eq.s32.totalorder %s16, 1
      %p34 = por %p32, %p33
      %p35 = scmp.ne.s32.totalorder %s24, %s25
      %p36 = scmp.eq.s32.totalorder %s16, 0
      %p37 = por %p35, %p36
      %p38 = scmp.ne.s32.totalorder %s24, %s25
      %p39 = scmp.eq.s32.totalorder %s17, 1
      %p40 = por %p38, %p39
      %p42 = scmp.ne.s32.totalorder %s25, %s41
      %p43 = scmp.eq.s32.totalorder %s17, 0
      %p44 = por %p42, %p43
      %s46 = sadd.s32 %s45, 1
      %p49 = scmp.eq.s32.totalorder %s11, 1
      %p50 = scmp.ne.s32.totalorder %s45, %s47
      %p51 = scmp.eq.s32.totalorder %s11, 0
      %p52 = por %p50, %p51
      %p53 = scmp.ne.s32.totalorder %s45, %s47
      %p54 = scmp.eq.s32.totalorder %s16, 1
      %p55 = por %p53, %p54
      %p56 = scmp.ne.s32.totalorder %s47, %s48
      %p57 = scmp.eq.s32.totalorder %s16, 0
      %p58 = por %p56, %p57
      %p59 = scmp.ne.s32.totalorder %s47, %s48
      %p60 = scmp.eq.s32.totalorder %s17, 1
      %p61 = por %p59, %p60
      %p63 = scmp.ne.s32.totalorder %s48, %s62
      %p64 = scmp.eq.s32.totalorder %s17, 0
      %p65 = por %p63, %p64
      %s66 = ssub.s32 %s11, %s18
      %p67 = scmp.eq.s32.totalorder %s66, 0
      %s69 = sadd.s32 %s68, 1
      %s70 = scalar_select %p67, %s68, %s69
      %p73 = pneg %p67
      %p74 = scmp.eq.s32.totalorder %s11, 1
      %p75 = por %p73, %p74
      %p76 = scmp.ne.s32.totalorder %s68, %s71
      %p77 = scmp.eq.s32.totalorder %s11, 0
      %p78 = por %p76, %p77
      %p79 = scmp.ne.s32.totalorder %s68, %s71
      %p80 = scmp.eq.s32.totalorder %s16, 1
      %p81 = por %p79, %p80
      %p82 = scmp.ne.s32.totalorder %s71, %s72
      %p83 = scmp.eq.s32.totalorder %s16, 0
      %p84 = por %p82, %p83
      %p85 = scmp.ne.s32.totalorder %s71, %s72
      %p86 = scmp.eq.s32.totalorder %s17, 1
      %p87 = por %p85, %p86
      %p89 = scmp.ne.s32.totalorder %s72, %s88
      %p90 = scmp.eq.s32.totalorder %s17, 0
      %p91 = por %p89, %p90
      %p92 = scmp.le.s32.totalorder 1, %s11
      %p93 = scmp.lt.s32.totalorder %s11, 3
      %p94 = pnand %p92, %p93
      %p95 = pneg %p94
      // Predicated region
      $region9: #{tpu_custom_call.1} parent=5 // pred_check
        _
      $region10: #{tpu_custom_call.1} parent=5 // pred_check_branch
        %97 = sbr.rel (%p94) target = $region12
      $region11: #{tpu_custom_call.1} parent=5 // pred_region
        %s98 = ssub.s32 %s11, 1
        // Predicated region
        $region13: #{tpu_custom_call.1} parent=11 // pred_check
          %p99 = pneg %p58
        $region14: #{tpu_custom_call.1} parent=11 // pred_check_branch
          %101 = sbr.rel (%p99) target = $region16
        $region15: #{tpu_custom_call.1} parent=11 // pred_region
          _
        $region16: #{tpu_custom_call.1} parent=11 // pred_fallthru
          _
      $region12: #{tpu_custom_call.1} parent=5 // pred_fallthru
        _
      %p102 = scmp.lt.s32.totalorder %s11, 2
      // Predicated region
      $region17: #{tpu_custom_call.1} parent=5 // pred_check
        %p103 = pneg %p102
      $region18: #{tpu_custom_call.1} parent=5 // pred_check_branch
        %105 = sbr.rel (%p103) target = $region20
      $region19: #{tpu_custom_call.1} parent=5 // pred_region
        // Predicated region
        $region21: #{tpu_custom_call.1} parent=19 // pred_check
          %p106 = pneg %p31
        $region22: #{tpu_custom_call.1} parent=19 // pred_check_branch
          %108 = sbr.rel (%p106) target = $region24
        $region23: #{tpu_custom_call.1} parent=19 // pred_region
          %s109 = smul.u32 16, %s11
          %p110 = scmp.lt.s32.totalorder %s109, 31
          %s111 = scalar_select %p110, %s109, 31
          %s112 = smul.addr %s111, 8
          %s113 = scalar_lea.vmem %s0, %s112
          %s114 = smul.u32 16, %s11
        $region24: #{tpu_custom_call.1} parent=19 // pred_fallthru
          _
      $region20: #{tpu_custom_call.1} parent=5 // pred_fallthru
        _
      %p115 = scmp.le.s32.totalorder 1, %s11
      %p116 = scmp.lt.s32.totalorder %s11, 3
      %p117 = pnand %p115, %p116
      %p118 = pneg %p117
      // Predicated region
      $region25: #{tpu_custom_call.1} parent=5 // pred_check
        _
      $region26: #{tpu_custom_call.1} parent=5 // pred_check_branch
        %120 = sbr.rel (%p117) target = $region28
      $region27: #{tpu_custom_call.1} parent=5 // pred_region
        %s121 = ssub.s32 %s11, 1
        %s122 = smul.u32 16, %s16
        %p123 = scmp.lt.s32.totalorder %s122, 31
        %s124 = scalar_select %p123, %s122, 31
        %s125 = smul.addr %s124, 8
        %s126 = scalar_lea.vmem %s0, %s125
        %p127 = pneg %p37
        %p128 = pneg %p34
        %p129 = pneg %p58
        %p130 = pneg %p55
        %p131 = pneg %p84
        %p132 = pneg %p81
        %s133 = sand.u32 %s71, 1
        %s134 = scalar_lea.sflag [#allocation3], %s133
        %s135 = sand.u32 %s71, 1
        %s136 = smul.addr %s135, 128
        %s137 = scalar_lea.vmem [#allocation2], %s136
        %s138 = smul.u32 16, %s16
        %p139 = scmp.lt.s32.totalorder %s138, 31
        %s140 = scalar_select %p139, %s138, 31
        %s141 = smul.addr %s140, 8
        %s142 = scalar_lea.vmem %s0, %s141
        %s143 = smul.u32 16, %s16
        %s144 = smul.u32 16, %s16
        %v145 = vld [vmem:[%s142] sm:$0xff]
        %v146 = vld [vmem:[%s142 + $0x8] sm:$0xff]
        %v147 = vld [vmem:[%s142 + $0x10] sm:$0xff]
        %v148 = vld [vmem:[%s142 + $0x18] sm:$0xff]
        %v149 = vld [vmem:[%s142 + $0x20] sm:$0xff]
        %v150 = vld [vmem:[%s142 + $0x28] sm:$0xff]
        %v151 = vld [vmem:[%s142 + $0x30] sm:$0xff]
        %v152 = vld [vmem:[%s142 + $0x38] sm:$0xff]
        %v153 = vld [vmem:[%s142 + $0x40] sm:$0xff]
        %v154 = vld [vmem:[%s142 + $0x48] sm:$0xff]
        %v155 = vld [vmem:[%s142 + $0x50] sm:$0xff]
        %v156 = vld [vmem:[%s142 + $0x58] sm:$0xff]
        %v157 = vld [vmem:[%s142 + $0x60] sm:$0xff]
        %v158 = vld [vmem:[%s142 + $0x68] sm:$0xff]
        %v159 = vld [vmem:[%s142 + $0x70] sm:$0xff]
        %v160 = vld [vmem:[%s142 + $0x78] sm:$0xff]
        %v161 = vld [vmem:[%s1] sm:$0xff]
        %v162 = vld [vmem:[%s1 + $0x8] sm:$0xff]
        %v163 = vld [vmem:[%s1 + $0x10] sm:$0xff]
        %v164 = vld [vmem:[%s1 + $0x18] sm:$0xff]
        %v165 = vld [vmem:[%s1 + $0x20] sm:$0xff]
        %v166 = vld [vmem:[%s1 + $0x28] sm:$0xff]
        %v167 = vld [vmem:[%s1 + $0x30] sm:$0xff]
        %v168 = vld [vmem:[%s1 + $0x38] sm:$0xff]
        %v169 = vld [vmem:[%s1 + $0x40] sm:$0xff]
        %v170 = vld [vmem:[%s1 + $0x48] sm:$0xff]
        %v171 = vld [vmem:[%s1 + $0x50] sm:$0xff]
        %v172 = vld [vmem:[%s1 + $0x58] sm:$0xff]
        %v173 = vld [vmem:[%s1 + $0x60] sm:$0xff]
        %v174 = vld [vmem:[%s1 + $0x68] sm:$0xff]
        %v175 = vld [vmem:[%s1 + $0x70] sm:$0xff]
        %v176 = vld [vmem:[%s1 + $0x78] sm:$0xff]
        %vm177 = vcmask 523264
        %v179 = vsel %vm177, %v145, 0
        %v182 = vsel %vm177, %v146, 0
        %v185 = vsel %vm177, %v147, 0
        %v188 = vsel %vm177, %v148, 0
        %v191 = vsel %vm177, %v149, 0
        %v194 = vsel %vm177, %v150, 0
        %v197 = vsel %vm177, %v151, 0
        %v200 = vsel %vm177, %v152, 0
        %v203 = vsel %vm177, %v153, 0
        %v206 = vsel %vm177, %v154, 0
        %v209 = vsel %vm177, %v155, 0
        %v212 = vsel %vm177, %v156, 0
        %v215 = vsel %vm177, %v157, 0
        %v218 = vsel %vm177, %v158, 0
        %v221 = vsel %vm177, %v159, 0
        %v224 = vsel %vm177, %v160, 0
        %v227 = vsel %vm177, %v161, 0
        %v230 = vsel %vm177, %v162, 0
        %v233 = vsel %vm177, %v163, 0
        %v236 = vsel %vm177, %v164, 0
        %v239 = vsel %vm177, %v165, 0
        %v242 = vsel %vm177, %v166, 0
        %v245 = vsel %vm177, %v167, 0
        %v248 = vsel %vm177, %v168, 0
        %v251 = vsel %vm177, %v169, 0
        %v254 = vsel %vm177, %v170, 0
        %v257 = vsel %vm177, %v171, 0
        %v260 = vsel %vm177, %v172, 0
        %v263 = vsel %vm177, %v173, 0
        %v266 = vsel %vm177, %v174, 0
        %v269 = vsel %vm177, %v175, 0
        %v272 = vsel %vm177, %v176, 0
        %274 = vmatprep.subr.mxu0 0.0
        %275 = vmatpush1.xpose.msra.mxu0 %v227
        %276 = vmatprep.subr.mxu0 0.0
        %277 = vmatpush1.xpose.msra.mxu0 %v230
        %278 = vmatprep.subr.mxu0 0.0
        %279 = vmatpush1.xpose.msra.mxu0 %v233
        %280 = vmatprep.subr.mxu0 0.0
        %281 = vmatpush1.xpose.msra.mxu0 %v236
        %282 = vmatprep.subr.mxu0 0.0
        %283 = vmatpush1.xpose.msra.mxu0 %v239
        %284 = vmatprep.subr.mxu0 0.0
        %285 = vmatpush1.xpose.msra.mxu0 %v242
        %286 = vmatprep.subr.mxu0 0.0
        %287 = vmatpush1.xpose.msra.mxu0 %v245
        %288 = vmatprep.subr.mxu0 0.0
        %289 = vmatpush1.xpose.msra.mxu0 %v248
        %290 = vmatprep.subr.mxu0 0.0
        %291 = vmatpush1.xpose.msra.mxu0 %v251
        %292 = vmatprep.subr.mxu0 0.0
        %293 = vmatpush1.xpose.msra.mxu0 %v254
        %294 = vmatprep.subr.mxu0 0.0
        %295 = vmatpush1.xpose.msra.mxu0 %v257
        %296 = vmatprep.subr.mxu0 0.0
        %297 = vmatpush1.xpose.msra.mxu0 %v260
        %298 = vmatprep.subr.mxu0 0.0
        %299 = vmatpush1.xpose.msra.mxu0 %v263
        %300 = vmatprep.subr.mxu0 0.0
        %301 = vmatpush1.xpose.msra.mxu0 %v266
        %302 = vmatprep.subr.mxu0 0.0
        %303 = vmatpush1.xpose.msra.mxu0 %v269
        %304 = vmatprep.subr.mxu0 0.0
        %305 = vmatpush1.xpose.msra.mxu0 %v272
        %306 = vmatprep.subr.mxu0 0.0
        %307 = vmatpush1.xpose.msra.mxu0 0.0
        %308 = vmatprep.subr.mxu0 0.0
        %309 = vmatpush1.xpose.msra.mxu0 0.0
        %310 = vmatprep.subr.mxu0 0.0
        %311 = vmatpush1.xpose.msra.mxu0 0.0
        %312 = vmatprep.subr.mxu0 0.0
        %313 = vmatpush1.xpose.msra.mxu0 0.0
        %314 = vmatprep.subr.mxu0 0.0
        %315 = vmatpush1.xpose.msra.mxu0 0.0
        %316 = vmatprep.subr.mxu0 0.0
        %317 = vmatpush1.xpose.msra.mxu0 0.0
        %318 = vmatprep.subr.mxu0 0.0
        %319 = vmatpush1.xpose.msra.mxu0 0.0
        %320 = vmatprep.subr.mxu0 0.0
        %321 = vmatpush1.xpose.msra.mxu0 0.0
        %322 = vmatprep.subr.mxu0 0.0
        %323 = vmatpush1.xpose.msra.mxu0 0.0
        %324 = vmatprep.subr.mxu0 0.0
        %325 = vmatpush1.xpose.msra.mxu0 0.0
        %326 = vmatprep.subr.mxu0 0.0
        %327 = vmatpush1.xpose.msra.mxu0 0.0
        %328 = vmatprep.subr.mxu0 0.0
        %329 = vmatpush1.xpose.msra.mxu0 0.0
        %330 = vmatprep.subr.mxu0 0.0
        %331 = vmatpush1.xpose.msra.mxu0 0.0
        %332 = vmatprep.subr.mxu0 0.0
        %333 = vmatpush1.xpose.msra.mxu0 0.0
        %334 = vmatprep.subr.mxu0 0.0
        %335 = vmatpush1.xpose.msra.mxu0 0.0
        %336 = vmatprep.subr.mxu0 0.0
        %337 = vmatpush1.xpose.msra.mxu0 0.0
        %338 = vmatprep.mubr.f32.mxu0 0.0
        %339 = vmatmul.mubr.f32.gmra.mrb[0].mxu0 %v179
        %v340 = vpop.f32.mrb[0].mxu0
        %v341 = vadd.f32 0.0, %v340
        %v342 = vpop.f32.mrb[0].mxu0
        %343 = vmatprep.mubr.f32.mxu0 0.0
        %344 = vmatmul.mubr.f32.gmra.mrb[0].mxu0 %v182
        %v345 = vpop.f32.mrb[0].mxu0
        %v346 = vadd.f32 0.0, %v345
        %v347 = vpop.f32.mrb[0].mxu0
        %348 = vmatprep.mubr.f32.mxu0 0.0
        %349 = vmatmul.mubr.f32.gmra.mrb[0].mxu0 %v185
        %v350 = vpop.f32.mrb[0].mxu0
        %v351 = vadd.f32 0.0, %v350
        %v352 = vpop.f32.mrb[0].mxu0
        %353 = vmatprep.mubr.f32.mxu0 0.0
        %354 = vmatmul.mubr.f32.gmra.mrb[0].mxu0 %v188
        %v355 = vpop.f32.mrb[0].mxu0
        %v356 = vadd.f32 0.0, %v355
        %v357 = vpop.f32.mrb[0].mxu0
        %358 = vmatprep.mubr.f32.mxu0 0.0
        %359 = vmatmul.mubr.f32.gmra.mrb[0].mxu0 %v191
        %v360 = vpop.f32.mrb[0].mxu0
        %v361 = vadd.f32 0.0, %v360
        %v362 = vpop.f32.mrb[0].mxu0
        %363 = vmatprep.mubr.f32.mxu0 0.0
        %364 = vmatmul.mubr.f32.gmra.mrb[0].mxu0 %v194
        %v365 = vpop.f32.mrb[0].mxu0
        %v366 = vadd.f32 0.0, %v365
        %v367 = vpop.f32.mrb[0].mxu0
        %368 = vmatprep.mubr.f32.mxu0 0.0
        %369 = vmatmul.mubr.f32.gmra.mrb[0].mxu0 %v197
        %v370 = vpop.f32.mrb[0].mxu0
        %v371 = vadd.f32 0.0, %v370
        %v372 = vpop.f32.mrb[0].mxu0
        %373 = vmatprep.mubr.f32.mxu0 0.0
        %374 = vmatmul.mubr.f32.gmra.mrb[0].mxu0 %v200
        %v375 = vpop.f32.mrb[0].mxu0
        %v376 = vadd.f32 0.0, %v375
        %v377 = vpop.f32.mrb[0].mxu0
        %378 = vmatprep.mubr.f32.mxu0 0.0
        %379 = vmatmul.mubr.f32.gmra.mrb[0].mxu0 %v203
        %v380 = vpop.f32.mrb[0].mxu0
        %v381 = vadd.f32 0.0, %v380
        %v382 = vpop.f32.mrb[0].mxu0
        %383 = vmatprep.mubr.f32.mxu0 0.0
        %384 = vmatmul.mubr.f32.gmra.mrb[0].mxu0 %v206
        %v385 = vpop.f32.mrb[0].mxu0
        %v386 = vadd.f32 0.0, %v385
        %v387 = vpop.f32.mrb[0].mxu0
        %388 = vmatprep.mubr.f32.mxu0 0.0
        %389 = vmatmul.mubr.f32.gmra.mrb[0].mxu0 %v209
        %v390 = vpop.f32.mrb[0].mxu0
        %v391 = vadd.f32 0.0, %v390
        %v392 = vpop.f32.mrb[0].mxu0
        %393 = vmatprep.mubr.f32.mxu0 0.0
        %394 = vmatmul.mubr.f32.gmra.mrb[0].mxu0 %v212
        %v395 = vpop.f32.mrb[0].mxu0
        %v396 = vadd.f32 0.0, %v395
        %v397 = vpop.f32.mrb[0].mxu0
        %398 = vmatprep.mubr.f32.mxu0 0.0
        %399 = vmatmul.mubr.f32.gmra.mrb[0].mxu0 %v215
        %v400 = vpop.f32.mrb[0].mxu0
        %v401 = vadd.f32 0.0, %v400
        %v402 = vpop.f32.mrb[0].mxu0
        %403 = vmatprep.mubr.f32.mxu0 0.0
        %404 = vmatmul.mubr.f32.gmra.mrb[0].mxu0 %v218
        %v405 = vpop.f32.mrb[0].mxu0
        %v406 = vadd.f32 0.0, %v405
        %v407 = vpop.f32.mrb[0].mxu0
        %408 = vmatprep.mubr.f32.mxu0 0.0
        %409 = vmatmul.mubr.f32.gmra.mrb[0].mxu0 %v221
        %v410 = vpop.f32.mrb[0].mxu0
        %v411 = vadd.f32 0.0, %v410
        %v412 = vpop.f32.mrb[0].mxu0
        %413 = vmatprep.mubr.f32.mxu0 0.0
        %414 = vmatmul.mubr.f32.gmra.mrb[0].mxu0 %v224
        %v415 = vpop.f32.mrb[0].mxu0
        %v416 = vadd.f32 0.0, %v415
        %v417 = vpop.f32.mrb[0].mxu0
        %418 = vdwg.mxu0
        %v419 = vmul.f32 %v341, 2.0
        %v420 = vmul.f32 %v346, 2.0
        %v421 = vmul.f32 %v351, 2.0
        %v422 = vmul.f32 %v356, 2.0
        %v423 = vmul.f32 %v361, 2.0
        %v424 = vmul.f32 %v366, 2.0
        %v425 = vmul.f32 %v371, 2.0
        %v426 = vmul.f32 %v376, 2.0
        %v427 = vmul.f32 %v381, 2.0
        %v428 = vmul.f32 %v386, 2.0
        %v429 = vmul.f32 %v391, 2.0
        %v430 = vmul.f32 %v396, 2.0
        %v431 = vmul.f32 %v401, 2.0
        %v432 = vmul.f32 %v406, 2.0
        %v433 = vmul.f32 %v411, 2.0
        %v434 = vmul.f32 %v416, 2.0
        %v435 = vsub.f32 2.0, %v419
        %v436 = vsub.f32 2.0, %v420
        %v437 = vsub.f32 2.0, %v421
        %v438 = vsub.f32 2.0, %v422
        %v439 = vsub.f32 2.0, %v423
        %v440 = vsub.f32 2.0, %v424
        %v441 = vsub.f32 2.0, %v425
        %v442 = vsub.f32 2.0, %v426
        %v443 = vsub.f32 2.0, %v427
        %v444 = vsub.f32 2.0, %v428
        %v445 = vsub.f32 2.0, %v429
        %v446 = vsub.f32 2.0, %v430
        %v447 = vsub.f32 2.0, %v431
        %v448 = vsub.f32 2.0, %v432
        %v449 = vsub.f32 2.0, %v433
        %v450 = vsub.f32 2.0, %v434
        %v451 = vmax.f32 %v435, 0.0
        %v452 = vmax.f32 %v436, 0.0
        %v453 = vmax.f32 %v437, 0.0
        %v454 = vmax.f32 %v438, 0.0
        %v455 = vmax.f32 %v439, 0.0
        %v456 = vmax.f32 %v440, 0.0
        %v457 = vmax.f32 %v441, 0.0
        %v458 = vmax.f32 %v442, 0.0
        %v459 = vmax.f32 %v443, 0.0
        %v460 = vmax.f32 %v444, 0.0
        %v461 = vmax.f32 %v445, 0.0
        %v462 = vmax.f32 %v446, 0.0
        %v463 = vmax.f32 %v447, 0.0
        %v464 = vmax.f32 %v448, 0.0
        %v465 = vmax.f32 %v449, 0.0
        %v466 = vmax.f32 %v450, 0.0
        %v467 = vadd.f32 %v451, 1e-08
        %v468 = vadd.f32 %v452, 1e-08
        %v469 = vadd.f32 %v453, 1e-08
        %v470 = vadd.f32 %v454, 1e-08
        %v471 = vadd.f32 %v455, 1e-08
        %v472 = vadd.f32 %v456, 1e-08
        %v473 = vadd.f32 %v457, 1e-08
        %v474 = vadd.f32 %v458, 1e-08
        %v475 = vadd.f32 %v459, 1e-08
        %v476 = vadd.f32 %v460, 1e-08
        %v477 = vadd.f32 %v461, 1e-08
        %v478 = vadd.f32 %v462, 1e-08
        %v479 = vadd.f32 %v463, 1e-08
        %v480 = vadd.f32 %v464, 1e-08
        %v481 = vadd.f32 %v465, 1e-08
        %v482 = vadd.f32 %v466, 1e-08
        %v483 = vrsqrt.pop %v467
        %v484 = vmul.f32 %v467, %v483
        %vm485 = vcmp.eq.f32.partialorder %v467, inf
        %v486 = vsel %vm485, %v467, %v484
        %vm487 = vcmp.eq.f32.partialorder %v467, 0.0
        %v488 = vand.u32 %v467, 2147483648
        %v489 = vsel %vm487, %v488, %v486
        %v490 = vrsqrt.pop %v468
        %v491 = vmul.f32 %v468, %v490
        %vm492 = vcmp.eq.f32.partialorder %v468, inf
        %v493 = vsel %vm492, %v468, %v491
        %vm494 = vcmp.eq.f32.partialorder %v468, 0.0
        %v495 = vand.u32 %v468, 2147483648
        %v496 = vsel %vm494, %v495, %v493
        %v497 = vrsqrt.pop %v469
        %v498 = vmul.f32 %v469, %v497
        %vm499 = vcmp.eq.f32.partialorder %v469, inf
        %v500 = vsel %vm499, %v469, %v498
        %vm501 = vcmp.eq.f32.partialorder %v469, 0.0
        %v502 = vand.u32 %v469, 2147483648
        %v503 = vsel %vm501, %v502, %v500
        %v504 = vrsqrt.pop %v470
        %v505 = vmul.f32 %v470, %v504
        %vm506 = vcmp.eq.f32.partialorder %v470, inf
        %v507 = vsel %vm506, %v470, %v505
        %vm508 = vcmp.eq.f32.partialorder %v470, 0.0
        %v509 = vand.u32 %v470, 2147483648
        %v510 = vsel %vm508, %v509, %v507
        %v511 = vrsqrt.pop %v471
        %v512 = vmul.f32 %v471, %v511
        %vm513 = vcmp.eq.f32.partialorder %v471, inf
        %v514 = vsel %vm513, %v471, %v512
        %vm515 = vcmp.eq.f32.partialorder %v471, 0.0
        %v516 = vand.u32 %v471, 2147483648
        %v517 = vsel %vm515, %v516, %v514
        %v518 = vrsqrt.pop %v472
        %v519 = vmul.f32 %v472, %v518
        %vm520 = vcmp.eq.f32.partialorder %v472, inf
        %v521 = vsel %vm520, %v472, %v519
        %vm522 = vcmp.eq.f32.partialorder %v472, 0.0
        %v523 = vand.u32 %v472, 2147483648
        %v524 = vsel %vm522, %v523, %v521
        %v525 = vrsqrt.pop %v473
        %v526 = vmul.f32 %v473, %v525
        %vm527 = vcmp.eq.f32.partialorder %v473, inf
        %v528 = vsel %vm527, %v473, %v526
        %vm529 = vcmp.eq.f32.partialorder %v473, 0.0
        %v530 = vand.u32 %v473, 2147483648
        %v531 = vsel %vm529, %v530, %v528
        %v532 = vrsqrt.pop %v474
        %v533 = vmul.f32 %v474, %v532
        %vm534 = vcmp.eq.f32.partialorder %v474, inf
        %v535 = vsel %vm534, %v474, %v533
        %vm536 = vcmp.eq.f32.partialorder %v474, 0.0
        %v537 = vand.u32 %v474, 2147483648
        %v538 = vsel %vm536, %v537, %v535
        %v539 = vrsqrt.pop %v475
        %v540 = vmul.f32 %v475, %v539
        %vm541 = vcmp.eq.f32.partialorder %v475, inf
        %v542 = vsel %vm541, %v475, %v540
        %vm543 = vcmp.eq.f32.partialorder %v475, 0.0
        %v544 = vand.u32 %v475, 2147483648
        %v545 = vsel %vm543, %v544, %v542
        %v546 = vrsqrt.pop %v476
        %v547 = vmul.f32 %v476, %v546
        %vm548 = vcmp.eq.f32.partialorder %v476, inf
        %v549 = vsel %vm548, %v476, %v547
        %vm550 = vcmp.eq.f32.partialorder %v476, 0.0
        %v551 = vand.u32 %v476, 2147483648
        %v552 = vsel %vm550, %v551, %v549
        %v553 = vrsqrt.pop %v477
        %v554 = vmul.f32 %v477, %v553
        %vm555 = vcmp.eq.f32.partialorder %v477, inf
        %v556 = vsel %vm555, %v477, %v554
        %vm557 = vcmp.eq.f32.partialorder %v477, 0.0
        %v558 = vand.u32 %v477, 2147483648
        %v559 = vsel %vm557, %v558, %v556
        %v560 = vrsqrt.pop %v478
        %v561 = vmul.f32 %v478, %v560
        %vm562 = vcmp.eq.f32.partialorder %v478, inf
        %v563 = vsel %vm562, %v478, %v561
        %vm564 = vcmp.eq.f32.partialorder %v478, 0.0
        %v565 = vand.u32 %v478, 2147483648
        %v566 = vsel %vm564, %v565, %v563
        %v567 = vrsqrt.pop %v479
        %v568 = vmul.f32 %v479, %v567
        %vm569 = vcmp.eq.f32.partialorder %v479, inf
        %v570 = vsel %vm569, %v479, %v568
        %vm571 = vcmp.eq.f32.partialorder %v479, 0.0
        %v572 = vand.u32 %v479, 2147483648
        %v573 = vsel %vm571, %v572, %v570
        %v574 = vrsqrt.pop %v480
        %v575 = vmul.f32 %v480, %v574
        %vm576 = vcmp.eq.f32.partialorder %v480, inf
        %v577 = vsel %vm576, %v480, %v575
        %vm578 = vcmp.eq.f32.partialorder %v480, 0.0
        %v579 = vand.u32 %v480, 2147483648
        %v580 = vsel %vm578, %v579, %v577
        %v581 = vrsqrt.pop %v481
        %v582 = vmul.f32 %v481, %v581
        %vm583 = vcmp.eq.f32.partialorder %v481, inf
        %v584 = vsel %vm583, %v481, %v582
        %vm585 = vcmp.eq.f32.partialorder %v481, 0.0
        %v586 = vand.u32 %v481, 2147483648
        %v587 = vsel %vm585, %v586, %v584
        %v588 = vrsqrt.pop %v482
        %v589 = vmul.f32 %v482, %v588
        %vm590 = vcmp.eq.f32.partialorder %v482, inf
        %v591 = vsel %vm590, %v482, %v589
        %vm592 = vcmp.eq.f32.partialorder %v482, 0.0
        %v593 = vand.u32 %v482, 2147483648
        %v594 = vsel %vm592, %v593, %v591
        %595 = vst [vmem:[%s137] sm:$0xff] %v489
        %596 = vst [vmem:[%s137 + $0x8] sm:$0xff] %v496
        %597 = vst [vmem:[%s137 + $0x10] sm:$0xff] %v503
        %598 = vst [vmem:[%s137 + $0x18] sm:$0xff] %v510
        %599 = vst [vmem:[%s137 + $0x20] sm:$0xff] %v517
        %600 = vst [vmem:[%s137 + $0x28] sm:$0xff] %v524
        %601 = vst [vmem:[%s137 + $0x30] sm:$0xff] %v531
        %602 = vst [vmem:[%s137 + $0x38] sm:$0xff] %v538
        %603 = vst [vmem:[%s137 + $0x40] sm:$0xff] %v545
        %604 = vst [vmem:[%s137 + $0x48] sm:$0xff] %v552
        %605 = vst [vmem:[%s137 + $0x50] sm:$0xff] %v559
        %606 = vst [vmem:[%s137 + $0x58] sm:$0xff] %v566
        %607 = vst [vmem:[%s137 + $0x60] sm:$0xff] %v573
        %608 = vst [vmem:[%s137 + $0x68] sm:$0xff] %v580
        %609 = vst [vmem:[%s137 + $0x70] sm:$0xff] %v587
        %610 = vst [vmem:[%s137 + $0x78] sm:$0xff] %v594
        %s611 = sand.u32 %s71, 1
        %s612 = scalar_lea.sflag [#allocation3], %s611
        %s613 = sand.u32 %s71, 1
        %s614 = smul.addr %s613, 128
        %s615 = scalar_lea.vmem [#allocation2], %s614
        // Predicated region
        $region29: #{tpu_custom_call.1} parent=27 // pred_check
          %p616 = pneg %p81
        $region30: #{tpu_custom_call.1} parent=27 // pred_check_branch
          %618 = sbr.rel (%p616) target = $region32
        $region31: #{tpu_custom_call.1} parent=27 // pred_region
          %s619 = smul.u32 16, %s16
          %s621 = ssub.s32 2048, 2048
          %622 = vsyncadd %s612, %s621
          %s623 = smul.addr %s619, 128
          %s624 = scalar_lea.hbm %s2, %s623
          %s625 = sshll.u32 %s615, 4
          %s626 = int_to_ptr.vmem [resolvable:$true] %s625
          %631 = dma.vmem_to_hbm [thread:$0]  %s626, 2048, %s624, %s612, 128, 128, 8
        $region32: #{tpu_custom_call.1} parent=27 // pred_fallthru
          _
      $region28: #{tpu_custom_call.1} parent=5 // pred_fallthru
        _
      %p632 = scmp.le.s32.totalorder 2, %s11
      // Predicated region
      $region33: #{tpu_custom_call.1} parent=5 // pred_check
        %p633 = pneg %p632
      $region34: #{tpu_custom_call.1} parent=5 // pred_check_branch
        %635 = sbr.rel (%p633) target = $region36
      $region35: #{tpu_custom_call.1} parent=5 // pred_region
        %s636 = ssub.s32 %s11, 2
        // Predicated region
        $region37: #{tpu_custom_call.1} parent=35 // pred_check
          %p637 = pneg %p87
        $region38: #{tpu_custom_call.1} parent=35 // pred_check_branch
          %639 = sbr.rel (%p637) target = $region40
        $region39: #{tpu_custom_call.1} parent=35 // pred_region
          %s640 = sand.u32 %s72, 1
          %s641 = scalar_lea.sflag [#allocation3], %s640
          %s642 = sand.u32 %s72, 1
          %s643 = smul.addr %s642, 128
          %s644 = scalar_lea.vmem [#allocation2], %s643
          %645 = dma.done %s641, 2048
        $region40: #{tpu_custom_call.1} parent=35 // pred_fallthru
          _
      $region36: #{tpu_custom_call.1} parent=5 // pred_fallthru
        _
    $region6: #{tpu_custom_call.1} parent=1 // loop_footer
      %s15 = sadd.s32 1, %s11
    $region7: #{tpu_custom_call.1} parent=1 // loop_footer_branch
      %10 = sbr.rel target = $region3
    $region8: #{tpu_custom_call.1} parent=1 // loop_exit
      _
    %646 = vsyncpa [#allocation3], 1
    %s647 = scalar_lea.sflag [#allocation3], 1
    %648 = vsyncpa %s647, 1

</llo_original>
